<compile_context>
chip_gen: v7x
topology: tpu7x:2x2x1
jax: 0.10.0
libtpu: 0.0.40
codegen_flags: <defaults>
</compile_context>

<pallas_src>
import functools

import jax
import jax.numpy as jnp
from jax.experimental import pallas as pl
from jax.experimental.pallas import tpu as pltpu

EPS = 1e-6  # PairwiseDistance default eps (module's self.eps matches)

# Minimum sublane tile (second-to-last dim) per itemsize: f32->8, bf16->16, i8->32.
_MIN_SUBLANE = {4: 8, 2: 16, 1: 32}


def _contrastive_loss_kernel(a_ref, b_ref, o_ref, *, n_total, tn, steps, needs_mask):
    # a_ref, b_ref: (tn, D) VMEM tiles; o_ref: (1, 1) f32 per-core partial sum.
    c = pl.program_id(0)  # core (parallel) axis
    i = pl.program_id(1)  # streaming (arbitrary) axis

    @pl.when(i == 0)
    def _init():
        o_ref[...] = jnp.zeros_like(o_ref)

    a = a_ref[...].astype(jnp.float32)
    b = b_ref[...].astype(jnp.float32)
    diff = a - b + jnp.float32(EPS)          # PyTorch adds eps before the norm
    sq = diff * diff                          # VPU

    # Lane-axis (D) reduce on the MXU instead of the XLU: (tn, D) @ (D, 1).
    # precision=HIGHEST keeps full f32 accuracy (default TPU matmul precision
    # would truncate the f32 operand to bf16). The MXU is otherwise idle.
    ones_col = jnp.ones((sq.shape[-1], 1), jnp.float32)
    sq_sum = jnp.dot(sq, ones_col,
                     preferred_element_type=jnp.float32,
                     precision=jax.lax.Precision.HIGHEST)   # (tn, 1)
    dist = jnp.sqrt(sq_sum)                                  # (tn, 1), EUP

    if needs_mask:
        # Logical (unclamped) block index -> global row ids; rows past the true
        # N (ragged tail or fully-phantom block) are selected to 0 AFTER the
        # sqrt so garbage/NaN in padded rows cannot leak into the sum.
        blk = c * steps + i
        row_ids = blk * tn + jax.lax.broadcasted_iota(jnp.int32, (tn, 1), 0)
        dist = jnp.where(row_ids < n_total, dist, jnp.float32(0.0))

    # Per-core running sum (resident (1,1) output block across the i axis).
    o_ref[...] += jnp.sum(dist, keepdims=True)


def _vmem_capacity_bytes() -> int:
    """VMEM capacity of the current TPU generation (conservative fallback)."""
    try:
        info = pltpu.get_tpu_info()
        cap = getattr(info, "vmem_capacity_bytes", None)
        if cap:
            return int(cap)
    except Exception:
        pass
    return 64 << 20  # v7x per-core VMEM; safe lower bound for all generations


def contrastive_loss(a: jax.Array, b: jax.Array, *,
                     max_block_rows: int | None = None,
                     num_cores: int = 2) -> jax.Array:
    """Scalar f32 loss, matching ContrastiveLoss.forward (mean L2 pairwise distance)."""
    assert a.shape == b.shape and a.ndim == 2
    n, d = a.shape
    itemsize = jnp.dtype(a.dtype).itemsize
    min_rows = _MIN_SUBLANE.get(itemsize, 8)

    # --- generation-aware tile sizing -------------------------------------
    vmem_cap = _vmem_capacity_bytes()
    budget = min(vmem_cap // 2, 96 << 20)
    # Per-row VMEM cost: 2 inputs x 2 pipeline buffers in the input dtype plus
    # ~3 f32 tile-sized intermediates (f32 cast, diff, square).
    per_row = d * (4 * itemsize + 3 * 4)
    rows_cap = max(min_rows, ((budget - (2 << 20)) // per_row) // min_rows * min_rows)
    rows_16m = max(min_rows, ((16 << 20) // (d * itemsize)) // min_rows * min_rows)
    rows_cap = min(rows_cap, rows_16m)           # bound per-step DMA latency
    if max_block_rows is not None:
        rows_cap = max(min_rows, (max_block_rows // min_rows) * min_rows)

    tn = n if n <= rows_cap else int(rows_cap)   # full-N block is always legal
    total_blocks = pl.cdiv(n, tn)

    # --- grid: (cores, steps) ----------------------------------------------
    nc = num_cores if total_blocks >= 2 else 1
    steps = pl.cdiv(total_blocks, nc)
    # Per-core coverage may exceed total_blocks (phantom last block) and the
    # last real block may be ragged; both handled by the in-kernel mask.
    needs_mask = (nc * steps * tn) != n
    last_block = total_blocks - 1

    def in_map(c, i):
        # Clamp the physical block index so no DMA ever goes out of bounds;
        # the kernel masks by the *logical* index, so duplicated reads of the
        # last block contribute exactly zero.
        return (jnp.minimum(c * steps + i, last_block), 0)

    # --- VMEM limit: inputs (double-buffered) + f32 intermediates + headroom -
    block_bytes = tn * d * itemsize
    f32_bytes = tn * d * 4
    vmem_bytes = 4 * block_bytes + 3 * f32_bytes + (4 << 20)
    vmem_bytes = int(min(max(32 << 20, vmem_bytes), vmem_cap - (4 << 20)))

    kernel = functools.partial(
        _contrastive_loss_kernel,
        n_total=n, tn=tn, steps=steps, needs_mask=needs_mask)

    partials = pl.pallas_call(
        kernel,
        out_shape=jax.ShapeDtypeStruct((nc, 1), jnp.float32),
        grid_spec=pltpu.PrefetchScalarGridSpec(
            num_scalar_prefetch=0,
            grid=(nc, steps),
            in_specs=[
                pl.BlockSpec((tn, d), in_map),
                pl.BlockSpec((tn, d), in_map),
            ],
            out_specs=pl.BlockSpec((1, 1), lambda c, i: (c, 0)),
        ),
        compiler_params=pltpu.CompilerParams(
            dimension_semantics=("parallel", "arbitrary"),
            vmem_limit_bytes=vmem_bytes,
        ),
    )(a, b)

    # Sum the per-core partials and divide by the true N in the wrapper
    # (also improves accumulation accuracy for large N).
    return jnp.sum(partials) / jnp.float32(n)


def _reference(a, b):
    a32 = a.astype(jnp.float32)
    b32 = b.astype(jnp.float32)
    return jnp.mean(jnp.sqrt(jnp.sum((a32 - b32 + EPS) ** 2, axis=-1)))


if __name__ == "__main__":
    key = jax.random.PRNGKey(0)
    ka, kb = jax.random.split(key)

    # Case 1: small batch — single block, single core, no masking path.
    N1, D1 = 8, 128
    a1 = jax.random.normal(ka, (N1, D1), dtype=jnp.float32)
    b1 = jax.random.normal(kb, (N1, D1), dtype=jnp.float32)
    loss1 = jax.block_until_ready(contrastive_loss(a1, b1))
    ref1 = _reference(a1, b1)
    assert jnp.allclose(loss1, ref1, rtol=1e-5, atol=1e-5), (loss1, ref1)

    # Case 2: force 8-row blocks -> 3 logical blocks over a (2 cores x 2 steps)
    # grid; exercises per-core partials, the clamped phantom block, and the
    # ragged-tail masking (N=20).
    N2, D2 = 20, 128
    a2 = jax.random.normal(ka, (N2, D2), dtype=jnp.float32)
    b2 = jax.random.normal(kb, (N2, D2), dtype=jnp.float32)
    loss2 = jax.block_until_ready(contrastive_loss(a2, b2, max_block_rows=8))
    ref2 = _reference(a2, b2)
    assert jnp.allclose(loss2, ref2, rtol=1e-5, atol=1e-5), (loss2, ref2)

    # Case 3: bf16 inputs (dtype-aware 16-row sublane minimum), f32 accumulate,
    # exact block coverage per core but a fully-phantom 4th block.
    N3, D3 = 48, 128
    a3 = jax.random.normal(ka, (N3, D3), dtype=jnp.float32).astype(jnp.bfloat16)
    b3 = jax.random.normal(kb, (N3, D3), dtype=jnp.float32).astype(jnp.bfloat16)
    loss3 = jax.block_until_ready(contrastive_loss(a3, b3, max_block_rows=16))
    ref3 = _reference(a3, b3)
    assert jnp.allclose(loss3, ref3, rtol=1e-5, atol=1e-5), (loss3, ref3)

    print("KERNEL_OK")
</pallas_src>

<mosaic_0001>
module attributes {stable_mosaic.version = 11 : i64} {
  func.func @_contrastive_loss_kernel(%arg0: i32, %arg1: i32, %arg2: memref<8x128xf32, #tpu.memory_space<vmem>>, %arg3: memref<8x128xf32, #tpu.memory_space<vmem>>, %arg4: memref<1x1xf32, #tpu.memory_space<vmem>>) attributes {dimension_semantics = [#tpu.dimension_semantics<parallel>, #tpu.dimension_semantics<arbitrary>], iteration_bounds = array<i64: 1, 1>, scalar_prefetch = 0 : i64, scratch_operands = 0 : i64, tpu.core_type = #tpu.core_type<tc>, window_params = [{transform_indices = @transform_0, window_bounds = array<i64: 8, 128>}, {transform_indices = @transform_1, window_bounds = array<i64: 8, 128>}, {transform_indices = @transform_2, window_bounds = array<i64: 1, 1>}]} {
    %c0_i32 = arith.constant 0 : i32
    %0 = arith.cmpi eq, %arg1, %c0_i32 : i32
    %1 = arith.extui %0 : i1 to i32
    %c0_i32_0 = arith.constant 0 : i32
    %2 = arith.cmpi ne, %1, %c0_i32_0 : i32
    scf.if %2 {
      %cst_11 = arith.constant 0.000000e+00 : f32
      %20 = vector.broadcast %cst_11 : f32 to vector<1x1xf32>
      %c0_12 = arith.constant 0 : index
      %c0_13 = arith.constant 0 : index
      %21 = vector.load %arg4[%c0_12, %c0_13] : memref<1x1xf32, #tpu.memory_space<vmem>>, vector<1x1xf32>
      tpu.vector_store %arg4[%c0_12, %c0_13], %20 {strides = array<i32>} : memref<1x1xf32, #tpu.memory_space<vmem>>, vector<1x1xf32>,
    } else {
    }
    %c0 = arith.constant 0 : index
    %c0_1 = arith.constant 0 : index
    %3 = vector.load %arg2[%c0, %c0_1] : memref<8x128xf32, #tpu.memory_space<vmem>>, vector<8x128xf32>
    %c0_2 = arith.constant 0 : index
    %c0_3 = arith.constant 0 : index
    %4 = vector.load %arg3[%c0_2, %c0_3] : memref<8x128xf32, #tpu.memory_space<vmem>>, vector<8x128xf32>
    %5 = arith.subf %3, %4 : vector<8x128xf32>
    %cst = arith.constant 9.99999997E-7 : f32
    %6 = vector.broadcast %cst : f32 to vector<8x128xf32>
    %7 = arith.addf %5, %6 : vector<8x128xf32>
    %8 = arith.mulf %7, %7 : vector<8x128xf32>
    %cst_4 = arith.constant 1.000000e+00 : f32
    %9 = vector.broadcast %cst_4 : f32 to vector<128x1xf32>
    %cst_5 = arith.constant dense<0.000000e+00> : vector<8x1xf32>
    %10 = tpu.matmul %8, %9, %cst_5 {dimension_numbers = #tpu.dot_dimension_numbers<[1], [0], [0], [1], [0, 0, 1, 1], [], []>, precision = #tpu.contract_precision<fp32>} : vector<8x128xf32>, vector<128x1xf32>, vector<8x1xf32> -> vector<8x1xf32>
    %11 = math.sqrt %10 : vector<8x1xf32>
    %c0_6 = arith.constant 0 : index
    %c0_7 = arith.constant 0 : index
    %12 = vector.load %arg4[%c0_6, %c0_7] : memref<1x1xf32, #tpu.memory_space<vmem>>, vector<1x1xf32>
    %13 = vector.shape_cast %11 : vector<8x1xf32> to vector<1x8x1xf32>
    %cst_8 = arith.constant dense<0.000000e+00> : vector<1xf32>
    %14 = vector.multi_reduction <add>, %13, %cst_8 [1, 2] : vector<1x8x1xf32> to vector<1xf32>
    %15 = vector.shape_cast %14 : vector<1xf32> to vector<1x1x1xf32>
    %16 = vector.extract %15[0, 0, 0] : f32 from vector<1x1x1xf32>
    %17 = vector.broadcast %16 : f32 to vector<1x1xf32>
    %18 = arith.addf %12, %17 : vector<1x1xf32>
    %c0_9 = arith.constant 0 : index
    %c0_10 = arith.constant 0 : index
    %19 = vector.load %arg4[%c0_9, %c0_10] : memref<1x1xf32, #tpu.memory_space<vmem>>, vector<1x1xf32>
    tpu.vector_store %arg4[%c0_9, %c0_10], %18 {strides = array<i32>} : memref<1x1xf32, #tpu.memory_space<vmem>>, vector<1x1xf32>,
    return
  }
  func.func @transform_0(%arg0: i32, %arg1: i32) -> (i32, i32) {
    %c1_i32 = arith.constant 1 : i32
    %0 = arith.muli %arg0, %c1_i32 : i32
    %1 = arith.addi %0, %arg1 : i32
    %c0_i32 = arith.constant 0 : i32
    %2 = arith.minsi %1, %c0_i32 : i32
    %c0_i32_0 = arith.constant 0 : i32
    %c0_i32_1 = arith.constant 0 : i32
    return %2, %c0_i32_0 : i32, i32
  }
  func.func @transform_1(%arg0: i32, %arg1: i32) -> (i32, i32) {
    %c1_i32 = arith.constant 1 : i32
    %0 = arith.muli %arg0, %c1_i32 : i32
    %1 = arith.addi %0, %arg1 : i32
    %c0_i32 = arith.constant 0 : i32
    %2 = arith.minsi %1, %c0_i32 : i32
    %c0_i32_0 = arith.constant 0 : i32
    %c0_i32_1 = arith.constant 0 : i32
    return %2, %c0_i32_0 : i32, i32
  }
  func.func @transform_2(%arg0: i32, %arg1: i32) -> (i32, i32) {
    %c0_i32 = arith.constant 0 : i32
    %c0_i32_0 = arith.constant 0 : i32
    return %arg0, %c0_i32 : i32, i32
  }
}

</mosaic_0001>

<llo_original>
// kernel: tpu_custom_call.1
$region0: #{tpu_custom_call.1}
  #allocation0 [shape = 'u32[]', space=smem, size = 0x4, offset = 0x4, fixed_abs, tag = 'smem constant byte address 0x4 - core index']
  #allocation1 [shape = 'u32[144,128]{1,0:T(1,128)}', space=vmem, size = 0x12000, scoped, tag = 'internal scratch']
  %s0 = inlined_call_operand.hbm [shape: f32[8,128], index: 0, kind: input, shape index: {}]
  %s1 = inlined_call_operand.hbm [shape: f32[8,128], index: 1, kind: input, shape index: {}]
  %s2 = inlined_call_operand.hbm [shape: f32[1,1], index: 2, kind: output, shape index: {}]
  %s3 = sld [smem:[#allocation0]]
  $region30: #{tpu_custom_call.1} parent=0
    _
  %s5 = ssub.s32 1, %s3
  %s6 = scalar_select 0, %s5, %s3
  $region1: #{tpu_custom_call.1} parent=0
    #allocation2 [shape = 'u8[4096]{0}', space=vmem, size = 0x1000, scoped, tag = 'input window, operand 0, single buffered']
    #allocation3 [shape = 's32[1]{0}', space=sflag, size = 0x4, scoped, tag = 'scoped memory for tpu_custom_call.1']
    #allocation4 [shape = 's32[1]{0}', space=sflag, size = 0x4, scoped, tag = 'scoped memory for tpu_custom_call.1']
    #allocation5 [shape = 'u8[4096]{0}', space=vmem, size = 0x1000, scoped, tag = 'input window, operand 1, single buffered']
    #allocation6 [shape = 's32[1]{0}', space=sflag, size = 0x4, scoped, tag = 'scoped memory for tpu_custom_call.1']
    #allocation7 [shape = 'u8[512]{0}', space=vmem, size = 0x400, scoped, tag = 'output window, operand 0, single buffered']
    %7 = vsyncpa [#allocation3], 0
    %8 = vsyncpa [#allocation6], 0
    %9 = vsyncpa [#allocation4], 0
    // Predicated region
    $region2: #{tpu_custom_call.1} parent=1 // pred_check
      _
    $region3: #{tpu_custom_call.1} parent=1 // pred_check_branch
      %11 = sbr.rel (0) target = $region5
    $region4: #{tpu_custom_call.1} parent=1 // pred_region
      %s12 = sadd.s32 0, 0
      %p13 = scmp.lt.s32.totalorder %s12, 0
      %s14 = scalar_select %p13, %s12, 0
      %s16 = ssub.s32 128, 128
      %17 = vsyncadd [#allocation3], %s16
      %s18 = smul.addr %s14, 128
      %s19 = scalar_lea.hbm %s0, %s18
      %s21 = sshll.u32 [#allocation2], 4
      %s22 = int_to_ptr.vmem [resolvable:$true] %s21
      %24 = dma.hbm_to_vmem [thread:$0]  %s19, 128, %s22, [#allocation3]
    $region5: #{tpu_custom_call.1} parent=1 // pred_fallthru
      _
    // Predicated region
    $region6: #{tpu_custom_call.1} parent=1 // pred_check
      _
    $region7: #{tpu_custom_call.1} parent=1 // pred_check_branch
      %26 = sbr.rel (0) target = $region9
    $region8: #{tpu_custom_call.1} parent=1 // pred_region
      %s27 = sadd.s32 0, 0
      %p28 = scmp.lt.s32.totalorder %s27, 0
      %s29 = scalar_select %p28, %s27, 0
      %s31 = ssub.s32 128, 128
      %32 = vsyncadd [#allocation6], %s31
      %s33 = smul.addr %s29, 128
      %s34 = scalar_lea.hbm %s1, %s33
      %s36 = sshll.u32 [#allocation5], 4
      %s37 = int_to_ptr.vmem [resolvable:$true] %s36
      %39 = dma.hbm_to_vmem [thread:$0]  %s34, 128, %s37, [#allocation6]
    $region9: #{tpu_custom_call.1} parent=1 // pred_fallthru
      _
    // Predicated region
    $region10: #{tpu_custom_call.1} parent=1 // pred_check
      _
    $region11: #{tpu_custom_call.1} parent=1 // pred_check_branch
      %41 = sbr.rel (0) target = $region13
    $region12: #{tpu_custom_call.1} parent=1 // pred_region
      %42 = dma.done [#allocation3], 128
    $region13: #{tpu_custom_call.1} parent=1 // pred_fallthru
      _
    // Predicated region
    $region14: #{tpu_custom_call.1} parent=1 // pred_check
      _
    $region15: #{tpu_custom_call.1} parent=1 // pred_check_branch
      %44 = sbr.rel (0) target = $region17
    $region16: #{tpu_custom_call.1} parent=1 // pred_region
      %45 = dma.done [#allocation6], 128
    $region17: #{tpu_custom_call.1} parent=1 // pred_fallthru
      _
    %s46 = sadd.s32 0, 0
    %p47 = scmp.lt.s32.totalorder %s46, 0
    %s48 = scalar_select %p47, %s46, 0
    %s49 = sadd.s32 0, 0
    %p50 = scmp.lt.s32.totalorder %s49, 0
    %s51 = scalar_select %p50, %s49, 0
    %p52 = scmp.eq.s32.totalorder 0, 0
    // Predicated region
    $region18: #{tpu_custom_call.1} parent=1 // pred_check
      %p53 = pneg %p52
    $region19: #{tpu_custom_call.1} parent=1 // pred_check_branch
      %55 = sbr.rel (%p53) target = $region21
    $region20: #{tpu_custom_call.1} parent=1 // pred_region
      %vm56 = vcmask 0
      %57 = vst.msk [vmem:[#allocation7] sm:$0x1] %vm56, 0.0
    $region21: #{tpu_custom_call.1} parent=1 // pred_fallthru
      _
    %v58 = vld [vmem:[#allocation2] sm:$0xff]
    %v59 = vld [vmem:[#allocation5] sm:$0xff]
    %v60 = vsub.f32 %v58, %v59
    %v61 = vadd.f32 %v60, 1e-06
    %v62 = vmul.f32 %v61, %v61
    %63 = vmatprep.subr.mxu0 0.0
    %64 = vmatpush1.msra.mxu0 1.0
    %65 = vmatprep.subr.mxu0 0.0
    %66 = vmatpush1.msra.mxu0 1.0
    %67 = vmatprep.subr.mxu0 0.0
    %68 = vmatpush1.msra.mxu0 1.0
    %69 = vmatprep.subr.mxu0 0.0
    %70 = vmatpush1.msra.mxu0 1.0
    %71 = vmatprep.subr.mxu0 0.0
    %72 = vmatpush1.msra.mxu0 1.0
    %73 = vmatprep.subr.mxu0 0.0
    %74 = vmatpush1.msra.mxu0 1.0
    %75 = vmatprep.subr.mxu0 0.0
    %76 = vmatpush1.msra.mxu0 1.0
    %77 = vmatprep.subr.mxu0 0.0
    %78 = vmatpush1.msra.mxu0 1.0
    %79 = vmatprep.subr.mxu0 0.0
    %80 = vmatpush1.msra.mxu0 1.0
    %81 = vmatprep.subr.mxu0 0.0
    %82 = vmatpush1.msra.mxu0 1.0
    %83 = vmatprep.subr.mxu0 0.0
    %84 = vmatpush1.msra.mxu0 1.0
    %85 = vmatprep.subr.mxu0 0.0
    %86 = vmatpush1.msra.mxu0 1.0
    %87 = vmatprep.subr.mxu0 0.0
    %88 = vmatpush1.msra.mxu0 1.0
    %89 = vmatprep.subr.mxu0 0.0
    %90 = vmatpush1.msra.mxu0 1.0
    %91 = vmatprep.subr.mxu0 0.0
    %92 = vmatpush1.msra.mxu0 1.0
    %93 = vmatprep.subr.mxu0 0.0
    %94 = vmatpush1.msra.mxu0 1.0
    %95 = vmatprep.subr.mxu0 0.0
    %96 = vmatpush1.msra.mxu0 0.0
    %97 = vmatprep.subr.mxu0 0.0
    %98 = vmatpush1.msra.mxu0 0.0
    %99 = vmatprep.subr.mxu0 0.0
    %100 = vmatpush1.msra.mxu0 0.0
    %101 = vmatprep.subr.mxu0 0.0
    %102 = vmatpush1.msra.mxu0 0.0
    %103 = vmatprep.subr.mxu0 0.0
    %104 = vmatpush1.msra.mxu0 0.0
    %105 = vmatprep.subr.mxu0 0.0
    %106 = vmatpush1.msra.mxu0 0.0
    %107 = vmatprep.subr.mxu0 0.0
    %108 = vmatpush1.msra.mxu0 0.0
    %109 = vmatprep.subr.mxu0 0.0
    %110 = vmatpush1.msra.mxu0 0.0
    %111 = vmatprep.subr.mxu0 0.0
    %112 = vmatpush1.msra.mxu0 0.0
    %113 = vmatprep.subr.mxu0 0.0
    %114 = vmatpush1.msra.mxu0 0.0
    %115 = vmatprep.subr.mxu0 0.0
    %116 = vmatpush1.msra.mxu0 0.0
    %117 = vmatprep.subr.mxu0 0.0
    %118 = vmatpush1.msra.mxu0 0.0
    %119 = vmatprep.subr.mxu0 0.0
    %120 = vmatpush1.msra.mxu0 0.0
    %121 = vmatprep.subr.mxu0 0.0
    %122 = vmatpush1.msra.mxu0 0.0
    %123 = vmatprep.subr.mxu0 0.0
    %124 = vmatpush1.msra.mxu0 0.0
    %125 = vmatprep.subr.mxu0 0.0
    %126 = vmatpush1.msra.mxu0 0.0
    %127 = vmatprep.mubr.f32.mxu0 0.0
    %v128 = vand.u32 %v62, 4294901760
    %v129 = vsub.f32 %v62, %v128
    %v130 = vand.u32 %v129, 4294901760
    %v131 = vsub.f32 %v129, %v130
    %v132 = vand.u32 %v131, 4294901760
    %133 = vmatmul.mubr.f32.gmra.mrb[0].mxu0 %v132
    %v134 = vpop.f32.mrb[0].mxu0
    %v135 = vadd.f32 0.0, %v134
    %v136 = vpop.f32.mrb[0].mxu0
    %137 = vdwg.mxu0
    %138 = vmatprep.subr.mxu0 0.0
    %139 = vmatpush1.msra.mxu0 0.0
    %140 = vmatprep.subr.mxu0 0.0
    %141 = vmatpush1.msra.mxu0 0.0
    %142 = vmatprep.subr.mxu0 0.0
    %143 = vmatpush1.msra.mxu0 0.0
    %144 = vmatprep.subr.mxu0 0.0
    %145 = vmatpush1.msra.mxu0 0.0
    %146 = vmatprep.subr.mxu0 0.0
    %147 = vmatpush1.msra.mxu0 0.0
    %148 = vmatprep.subr.mxu0 0.0
    %149 = vmatpush1.msra.mxu0 0.0
    %150 = vmatprep.subr.mxu0 0.0
    %151 = vmatpush1.msra.mxu0 0.0
    %152 = vmatprep.subr.mxu0 0.0
    %153 = vmatpush1.msra.mxu0 0.0
    %154 = vmatprep.subr.mxu0 0.0
    %155 = vmatpush1.msra.mxu0 0.0
    %156 = vmatprep.subr.mxu0 0.0
    %157 = vmatpush1.msra.mxu0 0.0
    %158 = vmatprep.subr.mxu0 0.0
    %159 = vmatpush1.msra.mxu0 0.0
    %160 = vmatprep.subr.mxu0 0.0
    %161 = vmatpush1.msra.mxu0 0.0
    %162 = vmatprep.subr.mxu0 0.0
    %163 = vmatpush1.msra.mxu0 0.0
    %164 = vmatprep.subr.mxu0 0.0
    %165 = vmatpush1.msra.mxu0 0.0
    %166 = vmatprep.subr.mxu0 0.0
    %167 = vmatpush1.msra.mxu0 0.0
    %168 = vmatprep.subr.mxu0 0.0
    %169 = vmatpush1.msra.mxu0 0.0
    %170 = vmatprep.subr.mxu0 0.0
    %171 = vmatpush1.msra.mxu0 0.0
    %172 = vmatprep.subr.mxu0 0.0
    %173 = vmatpush1.msra.mxu0 0.0
    %174 = vmatprep.subr.mxu0 0.0
    %175 = vmatpush1.msra.mxu0 0.0
    %176 = vmatprep.subr.mxu0 0.0
    %177 = vmatpush1.msra.mxu0 0.0
    %178 = vmatprep.subr.mxu0 0.0
    %179 = vmatpush1.msra.mxu0 0.0
    %180 = vmatprep.subr.mxu0 0.0
    %181 = vmatpush1.msra.mxu0 0.0
    %182 = vmatprep.subr.mxu0 0.0
    %183 = vmatpush1.msra.mxu0 0.0
    %184 = vmatprep.subr.mxu0 0.0
    %185 = vmatpush1.msra.mxu0 0.0
    %186 = vmatprep.subr.mxu0 0.0
    %187 = vmatpush1.msra.mxu0 0.0
    %188 = vmatprep.subr.mxu0 0.0
    %189 = vmatpush1.msra.mxu0 0.0
    %190 = vmatprep.subr.mxu0 0.0
    %191 = vmatpush1.msra.mxu0 0.0
    %192 = vmatprep.subr.mxu0 0.0
    %193 = vmatpush1.msra.mxu0 0.0
    %194 = vmatprep.subr.mxu0 0.0
    %195 = vmatpush1.msra.mxu0 0.0
    %196 = vmatprep.subr.mxu0 0.0
    %197 = vmatpush1.msra.mxu0 0.0
    %198 = vmatprep.subr.mxu0 0.0
    %199 = vmatpush1.msra.mxu0 0.0
    %200 = vmatprep.subr.mxu0 0.0
    %201 = vmatpush1.msra.mxu0 0.0
    %202 = vmatprep.mubr.f32.mxu0 0.0
    %v203 = vand.u32 %v62, 4294901760
    %204 = vmatmul.mubr.f32.gmra.mrb[0].mxu0 %v203
    %v205 = vpop.f32.mrb[0].mxu0
    %v206 = vadd.f32 %v135, %v205
    %v207 = vpop.f32.mrb[0].mxu0
    %208 = vdwg.mxu0
    %209 = vmatprep.subr.mxu0 0.0
    %210 = vmatpush1.msra.mxu0 0.0
    %211 = vmatprep.subr.mxu0 0.0
    %212 = vmatpush1.msra.mxu0 0.0
    %213 = vmatprep.subr.mxu0 0.0
    %214 = vmatpush1.msra.mxu0 0.0
    %215 = vmatprep.subr.mxu0 0.0
    %216 = vmatpush1.msra.mxu0 0.0
    %217 = vmatprep.subr.mxu0 0.0
    %218 = vmatpush1.msra.mxu0 0.0
    %219 = vmatprep.subr.mxu0 0.0
    %220 = vmatpush1.msra.mxu0 0.0
    %221 = vmatprep.subr.mxu0 0.0
    %222 = vmatpush1.msra.mxu0 0.0
    %223 = vmatprep.subr.mxu0 0.0
    %224 = vmatpush1.msra.mxu0 0.0
    %225 = vmatprep.subr.mxu0 0.0
    %226 = vmatpush1.msra.mxu0 0.0
    %227 = vmatprep.subr.mxu0 0.0
    %228 = vmatpush1.msra.mxu0 0.0
    %229 = vmatprep.subr.mxu0 0.0
    %230 = vmatpush1.msra.mxu0 0.0
    %231 = vmatprep.subr.mxu0 0.0
    %232 = vmatpush1.msra.mxu0 0.0
    %233 = vmatprep.subr.mxu0 0.0
    %234 = vmatpush1.msra.mxu0 0.0
    %235 = vmatprep.subr.mxu0 0.0
    %236 = vmatpush1.msra.mxu0 0.0
    %237 = vmatprep.subr.mxu0 0.0
    %238 = vmatpush1.msra.mxu0 0.0
    %239 = vmatprep.subr.mxu0 0.0
    %240 = vmatpush1.msra.mxu0 0.0
    %241 = vmatprep.subr.mxu0 0.0
    %242 = vmatpush1.msra.mxu0 0.0
    %243 = vmatprep.subr.mxu0 0.0
    %244 = vmatpush1.msra.mxu0 0.0
    %245 = vmatprep.subr.mxu0 0.0
    %246 = vmatpush1.msra.mxu0 0.0
    %247 = vmatprep.subr.mxu0 0.0
    %248 = vmatpush1.msra.mxu0 0.0
    %249 = vmatprep.subr.mxu0 0.0
    %250 = vmatpush1.msra.mxu0 0.0
    %251 = vmatprep.subr.mxu0 0.0
    %252 = vmatpush1.msra.mxu0 0.0
    %253 = vmatprep.subr.mxu0 0.0
    %254 = vmatpush1.msra.mxu0 0.0
    %255 = vmatprep.subr.mxu0 0.0
    %256 = vmatpush1.msra.mxu0 0.0
    %257 = vmatprep.subr.mxu0 0.0
    %258 = vmatpush1.msra.mxu0 0.0
    %259 = vmatprep.subr.mxu0 0.0
    %260 = vmatpush1.msra.mxu0 0.0
    %261 = vmatprep.subr.mxu0 0.0
    %262 = vmatpush1.msra.mxu0 0.0
    %263 = vmatprep.subr.mxu0 0.0
    %264 = vmatpush1.msra.mxu0 0.0
    %265 = vmatprep.subr.mxu0 0.0
    %266 = vmatpush1.msra.mxu0 0.0
    %267 = vmatprep.subr.mxu0 0.0
    %268 = vmatpush1.msra.mxu0 0.0
    %269 = vmatprep.subr.mxu0 0.0
    %270 = vmatpush1.msra.mxu0 0.0
    %271 = vmatprep.subr.mxu0 0.0
    %272 = vmatpush1.msra.mxu0 0.0
    %273 = vmatprep.mubr.f32.mxu0 0.0
    %v274 = vand.u32 %v62, 4294901760
    %v275 = vsub.f32 %v62, %v274
    %276 = vmatmul.mubr.f32.gmra.mrb[0].mxu0 %v275
    %v277 = vpop.f32.mrb[0].mxu0
    %v278 = vadd.f32 %v206, %v277
    %v279 = vpop.f32.mrb[0].mxu0
    %280 = vdwg.mxu0
    %281 = vmatprep.subr.mxu0 0.0
    %282 = vmatpush1.msra.mxu0 1.0
    %283 = vmatprep.subr.mxu0 0.0
    %284 = vmatpush1.msra.mxu0 1.0
    %285 = vmatprep.subr.mxu0 0.0
    %286 = vmatpush1.msra.mxu0 1.0
    %287 = vmatprep.subr.mxu0 0.0
    %288 = vmatpush1.msra.mxu0 1.0
    %289 = vmatprep.subr.mxu0 0.0
    %290 = vmatpush1.msra.mxu0 1.0
    %291 = vmatprep.subr.mxu0 0.0
    %292 = vmatpush1.msra.mxu0 1.0
    %293 = vmatprep.subr.mxu0 0.0
    %294 = vmatpush1.msra.mxu0 1.0
    %295 = vmatprep.subr.mxu0 0.0
    %296 = vmatpush1.msra.mxu0 1.0
    %297 = vmatprep.subr.mxu0 0.0
    %298 = vmatpush1.msra.mxu0 1.0
    %299 = vmatprep.subr.mxu0 0.0
    %300 = vmatpush1.msra.mxu0 1.0
    %301 = vmatprep.subr.mxu0 0.0
    %302 = vmatpush1.msra.mxu0 1.0
    %303 = vmatprep.subr.mxu0 0.0
    %304 = vmatpush1.msra.mxu0 1.0
    %305 = vmatprep.subr.mxu0 0.0
    %306 = vmatpush1.msra.mxu0 1.0
    %307 = vmatprep.subr.mxu0 0.0
    %308 = vmatpush1.msra.mxu0 1.0
    %309 = vmatprep.subr.mxu0 0.0
    %310 = vmatpush1.msra.mxu0 1.0
    %311 = vmatprep.subr.mxu0 0.0
    %312 = vmatpush1.msra.mxu0 1.0
    %313 = vmatprep.subr.mxu0 0.0
    %314 = vmatpush1.msra.mxu0 0.0
    %315 = vmatprep.subr.mxu0 0.0
    %316 = vmatpush1.msra.mxu0 0.0
    %317 = vmatprep.subr.mxu0 0.0
    %318 = vmatpush1.msra.mxu0 0.0
    %319 = vmatprep.subr.mxu0 0.0
    %320 = vmatpush1.msra.mxu0 0.0
    %321 = vmatprep.subr.mxu0 0.0
    %322 = vmatpush1.msra.mxu0 0.0
    %323 = vmatprep.subr.mxu0 0.0
    %324 = vmatpush1.msra.mxu0 0.0
    %325 = vmatprep.subr.mxu0 0.0
    %326 = vmatpush1.msra.mxu0 0.0
    %327 = vmatprep.subr.mxu0 0.0
    %328 = vmatpush1.msra.mxu0 0.0
    %329 = vmatprep.subr.mxu0 0.0
    %330 = vmatpush1.msra.mxu0 0.0
    %331 = vmatprep.subr.mxu0 0.0
    %332 = vmatpush1.msra.mxu0 0.0
    %333 = vmatprep.subr.mxu0 0.0
    %334 = vmatpush1.msra.mxu0 0.0
    %335 = vmatprep.subr.mxu0 0.0
    %336 = vmatpush1.msra.mxu0 0.0
    %337 = vmatprep.subr.mxu0 0.0
    %338 = vmatpush1.msra.mxu0 0.0
    %339 = vmatprep.subr.mxu0 0.0
    %340 = vmatpush1.msra.mxu0 0.0
    %341 = vmatprep.subr.mxu0 0.0
    %342 = vmatpush1.msra.mxu0 0.0
    %343 = vmatprep.subr.mxu0 0.0
    %344 = vmatpush1.msra.mxu0 0.0
    %345 = vmatprep.mubr.f32.mxu0 0.0
    %v346 = vand.u32 %v62, 4294901760
    %v347 = vsub.f32 %v62, %v346
    %v348 = vand.u32 %v347, 4294901760
    %349 = vmatmul.mubr.f32.gmra.mrb[0].mxu0 %v348
    %v350 = vpop.f32.mrb[0].mxu0
    %v351 = vadd.f32 %v278, %v350
    %v352 = vpop.f32.mrb[0].mxu0
    %353 = vdwg.mxu0
    %354 = vmatprep.subr.mxu0 0.0
    %355 = vmatpush1.msra.mxu0 0.0
    %356 = vmatprep.subr.mxu0 0.0
    %357 = vmatpush1.msra.mxu0 0.0
    %358 = vmatprep.subr.mxu0 0.0
    %359 = vmatpush1.msra.mxu0 0.0
    %360 = vmatprep.subr.mxu0 0.0
    %361 = vmatpush1.msra.mxu0 0.0
    %362 = vmatprep.subr.mxu0 0.0
    %363 = vmatpush1.msra.mxu0 0.0
    %364 = vmatprep.subr.mxu0 0.0
    %365 = vmatpush1.msra.mxu0 0.0
    %366 = vmatprep.subr.mxu0 0.0
    %367 = vmatpush1.msra.mxu0 0.0
    %368 = vmatprep.subr.mxu0 0.0
    %369 = vmatpush1.msra.mxu0 0.0
    %370 = vmatprep.subr.mxu0 0.0
    %371 = vmatpush1.msra.mxu0 0.0
    %372 = vmatprep.subr.mxu0 0.0
    %373 = vmatpush1.msra.mxu0 0.0
    %374 = vmatprep.subr.mxu0 0.0
    %375 = vmatpush1.msra.mxu0 0.0
    %376 = vmatprep.subr.mxu0 0.0
    %377 = vmatpush1.msra.mxu0 0.0
    %378 = vmatprep.subr.mxu0 0.0
    %379 = vmatpush1.msra.mxu0 0.0
    %380 = vmatprep.subr.mxu0 0.0
    %381 = vmatpush1.msra.mxu0 0.0
    %382 = vmatprep.subr.mxu0 0.0
    %383 = vmatpush1.msra.mxu0 0.0
    %384 = vmatprep.subr.mxu0 0.0
    %385 = vmatpush1.msra.mxu0 0.0
    %386 = vmatprep.subr.mxu0 0.0
    %387 = vmatpush1.msra.mxu0 0.0
    %388 = vmatprep.subr.mxu0 0.0
    %389 = vmatpush1.msra.mxu0 0.0
    %390 = vmatprep.subr.mxu0 0.0
    %391 = vmatpush1.msra.mxu0 0.0
    %392 = vmatprep.subr.mxu0 0.0
    %393 = vmatpush1.msra.mxu0 0.0
    %394 = vmatprep.subr.mxu0 0.0
    %395 = vmatpush1.msra.mxu0 0.0
    %396 = vmatprep.subr.mxu0 0.0
    %397 = vmatpush1.msra.mxu0 0.0
    %398 = vmatprep.subr.mxu0 0.0
    %399 = vmatpush1.msra.mxu0 0.0
    %400 = vmatprep.subr.mxu0 0.0
    %401 = vmatpush1.msra.mxu0 0.0
    %402 = vmatprep.subr.mxu0 0.0
    %403 = vmatpush1.msra.mxu0 0.0
    %404 = vmatprep.subr.mxu0 0.0
    %405 = vmatpush1.msra.mxu0 0.0
    %406 = vmatprep.subr.mxu0 0.0
    %407 = vmatpush1.msra.mxu0 0.0
    %408 = vmatprep.subr.mxu0 0.0
    %409 = vmatpush1.msra.mxu0 0.0
    %410 = vmatprep.subr.mxu0 0.0
    %411 = vmatpush1.msra.mxu0 0.0
    %412 = vmatprep.subr.mxu0 0.0
    %413 = vmatpush1.msra.mxu0 0.0
    %414 = vmatprep.subr.mxu0 0.0
    %415 = vmatpush1.msra.mxu0 0.0
    %416 = vmatprep.subr.mxu0 0.0
    %417 = vmatpush1.msra.mxu0 0.0
    %418 = vmatprep.mubr.f32.mxu0 0.0
    %v419 = vand.u32 %v62, 4294901760
    %420 = vmatmul.mubr.f32.gmra.mrb[0].mxu0 %v419
    %v421 = vpop.f32.mrb[0].mxu0
    %v422 = vadd.f32 %v351, %v421
    %v423 = vpop.f32.mrb[0].mxu0
    %424 = vdwg.mxu0
    %425 = vmatprep.subr.mxu0 0.0
    %426 = vmatpush1.msra.mxu0 1.0
    %427 = vmatprep.subr.mxu0 0.0
    %428 = vmatpush1.msra.mxu0 1.0
    %429 = vmatprep.subr.mxu0 0.0
    %430 = vmatpush1.msra.mxu0 1.0
    %431 = vmatprep.subr.mxu0 0.0
    %432 = vmatpush1.msra.mxu0 1.0
    %433 = vmatprep.subr.mxu0 0.0
    %434 = vmatpush1.msra.mxu0 1.0
    %435 = vmatprep.subr.mxu0 0.0
    %436 = vmatpush1.msra.mxu0 1.0
    %437 = vmatprep.subr.mxu0 0.0
    %438 = vmatpush1.msra.mxu0 1.0
    %439 = vmatprep.subr.mxu0 0.0
    %440 = vmatpush1.msra.mxu0 1.0
    %441 = vmatprep.subr.mxu0 0.0
    %442 = vmatpush1.msra.mxu0 1.0
    %443 = vmatprep.subr.mxu0 0.0
    %444 = vmatpush1.msra.mxu0 1.0
    %445 = vmatprep.subr.mxu0 0.0
    %446 = vmatpush1.msra.mxu0 1.0
    %447 = vmatprep.subr.mxu0 0.0
    %448 = vmatpush1.msra.mxu0 1.0
    %449 = vmatprep.subr.mxu0 0.0
    %450 = vmatpush1.msra.mxu0 1.0
    %451 = vmatprep.subr.mxu0 0.0
    %452 = vmatpush1.msra.mxu0 1.0
    %453 = vmatprep.subr.mxu0 0.0
    %454 = vmatpush1.msra.mxu0 1.0
    %455 = vmatprep.subr.mxu0 0.0
    %456 = vmatpush1.msra.mxu0 1.0
    %457 = vmatprep.subr.mxu0 0.0
    %458 = vmatpush1.msra.mxu0 0.0
    %459 = vmatprep.subr.mxu0 0.0
    %460 = vmatpush1.msra.mxu0 0.0
    %461 = vmatprep.subr.mxu0 0.0
    %462 = vmatpush1.msra.mxu0 0.0
    %463 = vmatprep.subr.mxu0 0.0
    %464 = vmatpush1.msra.mxu0 0.0
    %465 = vmatprep.subr.mxu0 0.0
    %466 = vmatpush1.msra.mxu0 0.0
    %467 = vmatprep.subr.mxu0 0.0
    %468 = vmatpush1.msra.mxu0 0.0
    %469 = vmatprep.subr.mxu0 0.0
    %470 = vmatpush1.msra.mxu0 0.0
    %471 = vmatprep.subr.mxu0 0.0
    %472 = vmatpush1.msra.mxu0 0.0
    %473 = vmatprep.subr.mxu0 0.0
    %474 = vmatpush1.msra.mxu0 0.0
    %475 = vmatprep.subr.mxu0 0.0
    %476 = vmatpush1.msra.mxu0 0.0
    %477 = vmatprep.subr.mxu0 0.0
    %478 = vmatpush1.msra.mxu0 0.0
    %479 = vmatprep.subr.mxu0 0.0
    %480 = vmatpush1.msra.mxu0 0.0
    %481 = vmatprep.subr.mxu0 0.0
    %482 = vmatpush1.msra.mxu0 0.0
    %483 = vmatprep.subr.mxu0 0.0
    %484 = vmatpush1.msra.mxu0 0.0
    %485 = vmatprep.subr.mxu0 0.0
    %486 = vmatpush1.msra.mxu0 0.0
    %487 = vmatprep.subr.mxu0 0.0
    %488 = vmatpush1.msra.mxu0 0.0
    %489 = vmatprep.mubr.f32.mxu0 0.0
    %v490 = vand.u32 %v62, 4294901760
    %491 = vmatmul.mubr.f32.gmra.mrb[0].mxu0 %v490
    %v492 = vpop.f32.mrb[0].mxu0
    %v493 = vadd.f32 %v422, %v492
    %v494 = vpop.f32.mrb[0].mxu0
    %495 = vdwg.mxu0
    %v496 = vrsqrt.pop %v493
    %v497 = vmul.f32 %v493, %v496
    %vm498 = vcmp.eq.f32.partialorder %v493, inf
    %v499 = vsel %vm498, %v493, %v497
    %vm500 = vcmp.eq.f32.partialorder %v493, 0.0
    %v501 = vand.u32 %v493, 2147483648
    %v502 = vsel %vm500, %v501, %v499
    %v503 = vld [vmem:[#allocation7] sm:$0x1]
    %vm504 = vcmask 7168
    %v505 = vsel %vm504, %v502, 0.0
    %506 = vadd.xlane.f32.xlu0 %v505
    %v507 = vpop.xlane.xlu0 %506
    %v508 = vrot.slane %v507, 4
    %v509 = vadd.f32 %v507, %v508
    %v510 = vrot.slane %v509, 2
    %v511 = vadd.f32 %v509, %v510
    %v512 = vrot.slane %v511, 1
    %v513 = vadd.f32 %v511, %v512
    %s514 = vtos %v513
    %v515 = vstv %s514
    %v516 = vadd.f32 %v503, %v515
    %vm517 = vcmask 0
    %518 = vst.msk [vmem:[#allocation7] sm:$0x1] %vm517, %v516
    // Predicated region
    $region22: #{tpu_custom_call.1} parent=1 // pred_check
      _
    $region23: #{tpu_custom_call.1} parent=1 // pred_check_branch
      %520 = sbr.rel (0) target = $region25
    $region24: #{tpu_custom_call.1} parent=1 // pred_region
      %s522 = ssub.s32 16, 16
      %523 = vsyncadd [#allocation4], %s522
      %s525 = sshll.u32 [#allocation7], 4
      %s526 = int_to_ptr.vmem [resolvable:$true] %s525
      %528 = dma.vmem_to_hbm [thread:$0]  %s526, 16, %s2, [#allocation4]
    $region25: #{tpu_custom_call.1} parent=1 // pred_fallthru
      _
    // Predicated region
    $region26: #{tpu_custom_call.1} parent=1 // pred_check
      _
    $region27: #{tpu_custom_call.1} parent=1 // pred_check_branch
      %530 = sbr.rel (0) target = $region29
    $region28: #{tpu_custom_call.1} parent=1 // pred_region
      %531 = dma.done [#allocation4], 16
    $region29: #{tpu_custom_call.1} parent=1 // pred_fallthru
      _
    %532 = vsyncpa [#allocation3], 1
    %533 = vsyncpa [#allocation6], 1
    %534 = vsyncpa [#allocation4], 1

</llo_original>
